<compile_context>
chip_gen: v6e
topology: v6e:2x2x1
jax: 0.10.0
libtpu: 0.0.40
codegen_flags: <defaults>
</compile_context>

<pallas_src>
import functools

import jax
import jax.numpy as jnp
from jax.experimental import pallas as pl
from jax.experimental.pallas import tpu as pltpu

_LANE = 128
_X_RESIDENT_BUDGET = 8 * 1024 * 1024  # keep bf16 x VMEM-resident up to 8 MiB (safe on v7x)


def _round_up(v, m):
    return (v + m - 1) // m * m


def _scoped_vmem_limit():
    """~64 MiB scoped on 128-MiB-VMEM chips (v5e/v6e), 32 MiB on v7x (64 MiB physical)."""
    try:
        cap = pltpu.get_tpu_info().vmem_capacity_bytes
    except Exception:
        cap = 64 * 1024 * 1024
    return max(32 * 1024 * 1024, min(cap // 2, 64 * 1024 * 1024))


def _pick_tile(pn, candidates, want_multiple_blocks=False):
    for cand in candidates:
        if pn % cand == 0 and (not want_multiple_blocks or pn // cand >= 2):
            return cand
    return pn


# ---------------- Pallas kernels ----------------

def appnp_step_kernel(a_ref, x_ref, h_ref, o_ref, acc_ref, *, alpha, tk, x_resident):
    """One APPNP hop, tiled: out = (1-alpha) * (A_norm @ x) + alpha * h."""
    k = pl.program_id(1)

    @pl.when(k == 0)
    def _():
        acc_ref[...] = jnp.zeros_like(acc_ref)

    if x_resident:
        start = pl.multiple_of(k * tk, tk)
        xk = x_ref[pl.ds(start, tk), :]          # x held resident in VMEM, slice k-strip
    else:
        xk = x_ref[...]                          # streamed per reduction tile
    # bf16 x bf16 on the MXU, f32 accumulation.
    acc_ref[...] += jnp.dot(a_ref[...], xk, preferred_element_type=jnp.float32)

    @pl.when(k == pl.num_programs(1) - 1)
    def _():
        o_ref[...] = ((1.0 - alpha) * acc_ref[...]
                      + alpha * h_ref[...]).astype(o_ref.dtype)


def closed_form_stats_kernel(x_ref, yt_ref, m_ref, g_ref, r_ref):
    """Per-core partial of the reduction over N (accumulated directly into the
    VMEM-resident output blocks):
         G_partial = (m*x)^T x          (fp, fp)
         R_partial = (m*x)^T Y_train    (fp, cp)
    Matches the module: the 0/1 mask is applied to the left operand only."""
    i = pl.program_id(1)

    @pl.when(i == 0)
    def _():
        g_ref[...] = jnp.zeros_like(g_ref)
        r_ref[...] = jnp.zeros_like(r_ref)

    x = x_ref[...]                       # (tm, fp) f32
    xm = x * m_ref[...]                  # diag(mask) @ x
    g_ref[...] += jax.lax.dot_general(
        xm, x, (((0,), (0,)), ((), ())), preferred_element_type=jnp.float32)
    r_ref[...] += jax.lax.dot_general(
        xm, yt_ref[...], (((0,), (0,)), ((), ())),
        preferred_element_type=jnp.float32)


def solve_kernel(ginv_ref, r_ref, sol_ref):
    """solution = G^{-1} @ R (tiny single-block matmul)."""
    sol_ref[...] = jnp.dot(ginv_ref[...], r_ref[...],
                           preferred_element_type=jnp.float32)


def predict_kernel(x_ref, sol_ref, yp_ref):
    """y_pred tile = x_gconv tile @ solution (row-tile axis is 'parallel')."""
    yp_ref[...] = jnp.dot(x_ref[...], sol_ref[...],
                          preferred_element_type=jnp.float32).astype(yp_ref.dtype)


# ---------------- plain-JAX glue ----------------

def gcn_norm_dense(edge_index, edge_weight, num_nodes):
    """Dense D^{-1/2} (A + I) D^{-1/2}, target-major: A_norm[target, source]."""
    # TODO(synk): for large sparse graphs this O(N^2) dense build should become a
    # CSR SpMM path (PrefetchScalarGridSpec row-offset gather) instead of dense A.
    src, dst = edge_index[0], edge_index[1]
    e = src.shape[0]
    if edge_weight is None:
        edge_weight = jnp.ones((e,), jnp.float32)
    loop = jnp.arange(num_nodes)
    src = jnp.concatenate([src, loop])
    dst = jnp.concatenate([dst, loop])
    w = jnp.concatenate([edge_weight, jnp.ones((num_nodes,), jnp.float32)])
    m = jnp.zeros((num_nodes, num_nodes), jnp.float32).at[dst, src].add(w)
    deg = m.sum(axis=1)
    dinv = jnp.where(deg > 0, jax.lax.rsqrt(deg), 0.0)
    return dinv[:, None] * m * dinv[None, :]


def semi_flgc_forward(x, edge_index, edge_weight, y_one_hot, train_mask,
                      *, K_hop=1, alpha=0.1, regularization_coef=1e-5):
    n, f = x.shape
    c = y_one_hot.shape[1]

    # lane-dense padded sizes; node padding kept minimal (tiles chosen to divide pn)
    fp = _round_up(f, _LANE)
    cp = _round_up(c, _LANE)
    pn = _round_up(n, _LANE)

    # row tile: prefer >=2 blocks so "parallel" axes shard across v7x's two TCs
    tm = _pick_tile(pn, (512, 256, 128, 64), want_multiple_blocks=True)
    # reduction tile: as big as divides pn (fewer grid steps, less per-step overhead)
    tk = _pick_tile(pn, (1024, 512, 384, 256, 128))

    vmem_limit = _scoped_vmem_limit()

    # ---- normalized dense adjacency (bf16 cast BEFORE padding -> half the O(N^2)
    # XLA-side intermediate, half the HBM stream into the kernel) ----
    a_norm = gcn_norm_dense(edge_index, edge_weight, n).astype(jnp.bfloat16)
    a_pad = jnp.pad(a_norm, ((0, pn - n), (0, pn - n)))
    x_pad = jnp.pad(x.astype(jnp.float32), ((0, pn - n), (0, fp - f)))
    x_pad_bf16 = x_pad.astype(jnp.bfloat16)     # pre-cast matmul operand (no in-kernel cast)

    # keep bf16 x fully VMEM-resident when it fits; otherwise stream per reduction tile
    x_resident = pn * fp * 2 <= _X_RESIDENT_BUDGET
    x_spec = (pl.BlockSpec((pn, fp), lambda i, k: (0, 0)) if x_resident
              else pl.BlockSpec((tk, fp), lambda i, k: (k, 0)))

    x_reads = 1 if x_resident else pn // tm
    appnp_flops = 2 * pn * pn * fp
    appnp_bytes = pn * pn * 2 + x_reads * pn * fp * 2 + 2 * pn * fp * 4  # A + x + (h, out)

    # ---- PageRankAgg (APPNP) propagation ----
    appnp_step = pl.pallas_call(
        functools.partial(appnp_step_kernel, alpha=alpha, tk=tk, x_resident=x_resident),
        out_shape=jax.ShapeDtypeStruct((pn, fp), jnp.float32),
        grid=(pn // tm, pn // tk),
        in_specs=[
            pl.BlockSpec((tm, tk), lambda i, k: (i, k)),   # A_norm tile (bf16, streamed)
            x_spec,                                        # x (bf16, resident or streamed)
            pl.BlockSpec((tm, fp), lambda i, k: (i, 0)),   # h tile (f32, resident over k)
        ],
        out_specs=pl.BlockSpec((tm, fp), lambda i, k: (i, 0)),
        scratch_shapes=[pltpu.VMEM((tm, fp), jnp.float32)],
        compiler_params=pltpu.CompilerParams(
            dimension_semantics=("parallel", "arbitrary"),
            vmem_limit_bytes=vmem_limit),
        cost_estimate=pl.CostEstimate(flops=appnp_flops, transcendentals=0,
                                      bytes_accessed=appnp_bytes),
    )

    h_pad = x_pad
    x_gconv = x_pad
    x_bf16 = x_pad_bf16
    # TODO(synk): for K_hop >> 1 move the hop loop in-kernel with A (or x) held resident
    # in VMEM so the bf16 adjacency is not re-streamed from HBM once per hop.
    for _ in range(K_hop):
        x_gconv = appnp_step(a_pad, x_bf16, h_pad)
        x_bf16 = x_gconv.astype(jnp.bfloat16)

    # ---- closed-form solution statistics (tiled reduction over N, f32 inputs to
    # preserve normal-equation conditioning; 2-way core split on the leading axis) ----
    m_col = train_mask.astype(jnp.float32).reshape(n, 1)
    m_pad = jnp.pad(m_col, ((0, pn - n), (0, 0)))
    y_train = y_one_hot.astype(jnp.float32) * m_col          # Y_train = y * mask
    yt_pad = jnp.pad(y_train, ((0, pn - n), (0, cp - c)))

    n_row_tiles = pn // tm
    ncores = 2 if (n_row_tiles % 2 == 0 and n_row_tiles >= 2) else 1
    tiles_per_core = n_row_tiles // ncores
    row_map = lambda c_, i_: (c_ * tiles_per_core + i_, 0)

    stats_flops = 2 * pn * fp * (fp + cp)
    stats_bytes = pn * (fp + cp + 1) * 4 + ncores * (fp * fp + fp * cp) * 4

    g_parts, r_parts = pl.pallas_call(
        closed_form_stats_kernel,
        out_shape=(jax.ShapeDtypeStruct((ncores, fp, fp), jnp.float32),
                   jax.ShapeDtypeStruct((ncores, fp, cp), jnp.float32)),
        grid=(ncores, tiles_per_core),
        in_specs=[
            pl.BlockSpec((tm, fp), row_map),
            pl.BlockSpec((tm, cp), row_map),
            pl.BlockSpec((tm, 1), row_map),
        ],
        out_specs=(pl.BlockSpec((None, fp, fp), lambda c_, i_: (c_, 0, 0)),
                   pl.BlockSpec((None, fp, cp), lambda c_, i_: (c_, 0, 0))),
        compiler_params=pltpu.CompilerParams(
            dimension_semantics=("parallel", "arbitrary"),
            vmem_limit_bytes=vmem_limit),
        cost_estimate=pl.CostEstimate(flops=stats_flops, transcendentals=0,
                                      bytes_accessed=stats_bytes),
    )(x_gconv, yt_pad, m_pad)

    g = g_parts.sum(axis=0) + regularization_coef * jnp.eye(fp, dtype=jnp.float32)
    r = r_parts.sum(axis=0)

    # TODO(synk): torch.inverse (dense matrix inverse) has no clean Pallas equivalent;
    # done with jnp.linalg.inv in plain JAX (the padded G is block-diagonal
    # [G_real + reg*I, 0; 0, reg*I], so its inverse is exact).
    g_inv = jnp.linalg.inv(g)

    # ---- solution = G^{-1} R (tiny single-block kernel; un-fused from prediction so
    # the prediction row-tile axis can be 'parallel' across v7x's two TensorCores) ----
    sol = pl.pallas_call(
        solve_kernel,
        out_shape=jax.ShapeDtypeStruct((fp, cp), jnp.float32),
        compiler_params=pltpu.CompilerParams(vmem_limit_bytes=vmem_limit),
        cost_estimate=pl.CostEstimate(flops=2 * fp * fp * cp, transcendentals=0,
                                      bytes_accessed=(fp * fp + 2 * fp * cp) * 4),
    )(g_inv, r)

    # ---- y_pred = x_gconv @ solution (row-tiled, fully parallel grid) ----
    y_pred = pl.pallas_call(
        predict_kernel,
        out_shape=jax.ShapeDtypeStruct((pn, cp), jnp.float32),
        grid=(pn // tm,),
        in_specs=[
            pl.BlockSpec((tm, fp), lambda i: (i, 0)),
            pl.BlockSpec((fp, cp), lambda i: (0, 0)),
        ],
        out_specs=pl.BlockSpec((tm, cp), lambda i: (i, 0)),
        compiler_params=pltpu.CompilerParams(
            dimension_semantics=("parallel",),
            vmem_limit_bytes=vmem_limit),
        cost_estimate=pl.CostEstimate(flops=2 * pn * fp * cp, transcendentals=0,
                                      bytes_accessed=(pn * fp + fp * cp + pn * cp) * 4),
    )(x_gconv, sol)

    return y_pred[:n, :c], x_gconv[:n, :f], sol[:f, :c]


if __name__ == "__main__":
    key = jax.random.PRNGKey(0)
    k_x, k_src, k_dst, k_lab = jax.random.split(key, 4)

    N, F, C, E = 64, 32, 8, 256
    x = jax.random.normal(k_x, (N, F), jnp.float32)
    src = jax.random.randint(k_src, (E,), 0, N)
    dst = jax.random.randint(k_dst, (E,), 0, N)
    edge_index = jnp.stack([src, dst])                        # (2, E)
    labels = jax.random.randint(k_lab, (N,), 0, C)
    y_one_hot = jax.nn.one_hot(labels, C, dtype=jnp.float32)  # (N, C)
    train_mask = jnp.arange(N) < 16                           # (N,) bool

    y_pred, embedding, solution = semi_flgc_forward(
        x, edge_index, None, y_one_hot, train_mask,
        K_hop=1, alpha=0.1, regularization_coef=1e-5)

    jax.block_until_ready(y_pred)
    assert y_pred.shape == (N, C)
    assert embedding.shape == (N, F)
    assert solution.shape == (F, C)
    assert bool(jnp.isfinite(y_pred).all())
    assert bool(jnp.isfinite(solution).all())
    print("KERNEL_OK")
</pallas_src>

<mosaic_0001>
module attributes {stable_mosaic.version = 11 : i64} {
  func.func @appnp_step_kernel(%arg0: i32, %arg1: i32, %arg2: memref<64x128xbf16, #tpu.memory_space<vmem>>, %arg3: memref<128x128xbf16, #tpu.memory_space<vmem>>, %arg4: memref<64x128xf32, #tpu.memory_space<vmem>>, %arg5: memref<64x128xf32, #tpu.memory_space<vmem>>, %arg6: memref<64x128xf32, #tpu.memory_space<vmem>>) attributes {dimension_semantics = [#tpu.dimension_semantics<parallel>, #tpu.dimension_semantics<arbitrary>], iteration_bounds = array<i64: 2, 1>, scalar_prefetch = 0 : i64, scratch_operands = 1 : i64, tpu.core_type = #tpu.core_type<tc>, window_params = [{transform_indices = @transform_0, window_bounds = array<i64: 64, 128>}, {pipeline_mode = #tpu.pipeline_mode<synchronous>, transform_indices = @transform_1, window_bounds = array<i64: 128, 128>}, {transform_indices = @transform_2, window_bounds = array<i64: 64, 128>}, {transform_indices = @transform_3, window_bounds = array<i64: 64, 128>}]} {
    %c0_i32 = arith.constant 0 : i32
    %0 = arith.cmpi eq, %arg1, %c0_i32 : i32
    %1 = arith.extui %0 : i1 to i32
    %c0_i32_0 = arith.constant 0 : i32
    %2 = arith.cmpi ne, %1, %c0_i32_0 : i32
    scf.if %2 {
      %cst_9 = arith.constant 0.000000e+00 : f32
      %15 = vector.broadcast %cst_9 : f32 to vector<64x128xf32>
      %c0_10 = arith.constant 0 : index
      %c0_11 = arith.constant 0 : index
      %16 = vector.load %arg6[%c0_10, %c0_11] : memref<64x128xf32, #tpu.memory_space<vmem>>, vector<64x128xf32>
      tpu.vector_store %arg6[%c0_10, %c0_11], %15 {strides = array<i32>} : memref<64x128xf32, #tpu.memory_space<vmem>>, vector<64x128xf32>,
    } else {
    }
    %c128_i32 = arith.constant 128 : i32
    %3 = arith.muli %arg1, %c128_i32 : i32
    %4 = tpu.assume_multiple %3, 128 : i32
    %5 = arith.index_cast %4 : i32 to index
    %c0 = arith.constant 0 : index
    %6 = vector.load %arg3[%5, %c0] : memref<128x128xbf16, #tpu.memory_space<vmem>>, vector<128x128xbf16>
    %c0_1 = arith.constant 0 : index
    %c0_2 = arith.constant 0 : index
    %7 = vector.load %arg6[%c0_1, %c0_2] : memref<64x128xf32, #tpu.memory_space<vmem>>, vector<64x128xf32>
    %c0_3 = arith.constant 0 : index
    %c0_4 = arith.constant 0 : index
    %8 = vector.load %arg2[%c0_3, %c0_4] : memref<64x128xbf16, #tpu.memory_space<vmem>>, vector<64x128xbf16>
    %cst = arith.constant dense<0.000000e+00> : vector<64x128xf32>
    %9 = tpu.matmul %8, %6, %cst {dimension_numbers = #tpu.dot_dimension_numbers<[1], [0], [0], [1], [0, 0, 1, 1], [], []>} : vector<64x128xbf16>, vector<128x128xbf16>, vector<64x128xf32> -> vector<64x128xf32>
    %10 = arith.addf %7, %9 : vector<64x128xf32>
    %c0_5 = arith.constant 0 : index
    %c0_6 = arith.constant 0 : index
    %11 = vector.load %arg6[%c0_5, %c0_6] : memref<64x128xf32, #tpu.memory_space<vmem>>, vector<64x128xf32>
    tpu.vector_store %arg6[%c0_5, %c0_6], %10 {strides = array<i32>} : memref<64x128xf32, #tpu.memory_space<vmem>>, vector<64x128xf32>,
    %c0_i32_7 = arith.constant 0 : i32
    %12 = arith.cmpi eq, %arg1, %c0_i32_7 : i32
    %13 = arith.extui %12 : i1 to i32
    %c0_i32_8 = arith.constant 0 : i32
    %14 = arith.cmpi ne, %13, %c0_i32_8 : i32
    scf.if %14 {
      %c0_9 = arith.constant 0 : index
      %c0_10 = arith.constant 0 : index
      %15 = vector.load %arg6[%c0_9, %c0_10] : memref<64x128xf32, #tpu.memory_space<vmem>>, vector<64x128xf32>
      %cst_11 = arith.constant 0.899999976 : f32
      %16 = vector.broadcast %cst_11 : f32 to vector<64x128xf32>
      %17 = arith.mulf %16, %15 : vector<64x128xf32>
      %c0_12 = arith.constant 0 : index
      %c0_13 = arith.constant 0 : index
      %18 = vector.load %arg4[%c0_12, %c0_13] : memref<64x128xf32, #tpu.memory_space<vmem>>, vector<64x128xf32>
      %cst_14 = arith.constant 1.000000e-01 : f32
      %19 = vector.broadcast %cst_14 : f32 to vector<64x128xf32>
      %20 = arith.mulf %19, %18 : vector<64x128xf32>
      %21 = arith.addf %17, %20 : vector<64x128xf32>
      %c0_15 = arith.constant 0 : index
      %c0_16 = arith.constant 0 : index
      %22 = vector.load %arg5[%c0_15, %c0_16] : memref<64x128xf32, #tpu.memory_space<vmem>>, vector<64x128xf32>
      tpu.vector_store %arg5[%c0_15, %c0_16], %21 {strides = array<i32>} : memref<64x128xf32, #tpu.memory_space<vmem>>, vector<64x128xf32>,
    } else {
    }
    return
  }
  func.func @transform_0(%arg0: i32, %arg1: i32) -> (i32, i32) {
    %c0_i32 = arith.constant 0 : i32
    return %arg0, %arg1 : i32, i32
  }
  func.func @transform_1(%arg0: i32, %arg1: i32) -> (i32, i32) {
    %c0_i32 = arith.constant 0 : i32
    %c0_i32_0 = arith.constant 0 : i32
    %c0_i32_1 = arith.constant 0 : i32
    return %c0_i32, %c0_i32_0 : i32, i32
  }
  func.func @transform_2(%arg0: i32, %arg1: i32) -> (i32, i32) {
    %c0_i32 = arith.constant 0 : i32
    %c0_i32_0 = arith.constant 0 : i32
    return %arg0, %c0_i32 : i32, i32
  }
  func.func @transform_3(%arg0: i32, %arg1: i32) -> (i32, i32) {
    %c0_i32 = arith.constant 0 : i32
    %c0_i32_0 = arith.constant 0 : i32
    return %arg0, %c0_i32 : i32, i32
  }
}

</mosaic_0001>

<llo_original>
// kernel: tpu_custom_call.1
$region0: #{tpu_custom_call.1}
  #allocation0 [shape = 'u32[]', space=smem, size = 0x4, offset = 0x4, fixed_abs, tag = 'smem constant byte address 0x4 - core index']
  #allocation1 [shape = 'u32[144,128]{1,0:T(1,128)}', space=vmem, size = 0x12000, scoped, tag = 'internal scratch']
  #allocation2 [shape = 'f32[64,128]{1,0:T(8,128)}', space=vmem, size = 0x8000, scoped, tag = 'scratch operand']
  %s0 = inlined_call_operand.hbm [shape: bf16[128,128], index: 0, kind: input, shape index: {}]
  %s1 = inlined_call_operand.hbm [shape: bf16[128,128], index: 1, kind: input, shape index: {}]
  %s2 = inlined_call_operand.hbm [shape: f32[128,128], index: 2, kind: input, shape index: {}]
  %s3 = inlined_call_operand.hbm [shape: f32[128,128], index: 3, kind: output, shape index: {}]
  %s4 = sld [smem:[#allocation0]]
  $region65: #{tpu_custom_call.1} parent=0
    _
  %s6 = ssub.s32 1, %s4
  %s7 = scalar_select 0, %s6, %s4
  $region1: #{tpu_custom_call.1} parent=0
    #allocation3 [shape = 'u8[32768]{0}', space=vmem, size = 0x8000, scoped, tag = 'input window, operand 0']
    #allocation4 [shape = 's32[2]{0}', space=sflag, size = 0x8, scoped, tag = 'scoped memory for tpu_custom_call.1']
    #allocation5 [shape = 's32[2]{0}', space=sflag, size = 0x8, scoped, tag = 'scoped memory for tpu_custom_call.1']
    #allocation6 [shape = 'u8[32768]{0}', space=vmem, size = 0x8000, scoped, tag = 'input window, operand 1, single buffered']
    #allocation7 [shape = 's32[1]{0}', space=sflag, size = 0x4, scoped, tag = 'scoped memory for tpu_custom_call.1']
    #allocation8 [shape = 'u8[65536]{0}', space=vmem, size = 0x10000, scoped, tag = 'input window, operand 2']
    #allocation9 [shape = 'u8[65536]{0}', space=vmem, size = 0x10000, scoped, tag = 'output window, operand 0']
    %8 = vsyncpa [#allocation4], 0
    %s9 = scalar_lea.sflag [#allocation4], 1
    %10 = vsyncpa %s9, 0
    %11 = vsyncpa [#allocation7], 0
    %12 = vsyncpa [#allocation5], 0
    %s13 = scalar_lea.sflag [#allocation5], 1
    %14 = vsyncpa %s13, 0
    loop: start=0, step=1, limit=4
    $region2: #{tpu_custom_call.1} parent=1 // loop_pre_header
      _
    $region3: #{tpu_custom_call.1} parent=1 // loop_header
      %s16 = sphi 0, %s20
      %p17 = scmp.ge.s32.totalorder %s16, 4
      %s23 = sphi 0, %s35
      %s24 = sphi 0, %s31
      %s25 = sphi 0, %s23
      %s26 = sphi 0, %s24
      %s27 = sphi 0, %s25
      %s28 = sphi 0, %s26
      %s40 = sphi 0, %s42
      %s43 = sphi 0, %s40
      %s44 = sphi 0, %s43
      %s60 = sphi 0, %s44
      %s64 = sphi 0, %s64
      %s66 = sphi 0, %s64
      %s67 = sphi 0, %s66
      %s81 = sphi 0, %s67
      %s87 = sphi 0, %s89
      %s90 = sphi 0, %s87
      %s91 = sphi 0, %s90
      %s107 = sphi 0, %s91
      %s113 = sphi 0, %s115
      %s116 = sphi 0, %s113
      %s117 = sphi 0, %s116
      %s133 = sphi 0, %s117
    $region4: #{tpu_custom_call.1} parent=1 // loop_header_branch
      %19 = sbr.rel (%p17) target = $region8
    $region5: #{tpu_custom_call.1} parent=1 // loop_body
      %s21 = ssub.s32 %s16, 1
      %s22 = ssub.s32 %s16, 2
      %s29 = sadd.s32 1, %s24
      %p30 = scmp.ge.s32.totalorder %s29, 1
      %s31 = scalar_select %p30, 0, %s29
      %s32 = sadd.s32 1, %s23
      %s33 = scalar_select %p30, %s32, %s23
      %p34 = scmp.ge.s32.totalorder %s33, 2
      %s35 = scalar_select %p34, 0, %s33
      %s36 = ssub.s32 %s23, %s35
      %s37 = ssub.s32 %s24, %s31
      %s38 = sor.u32 %s36, %s37
      %p39 = scmp.eq.s32.totalorder %s38, 0
      %s41 = sadd.s32 %s40, 1
      %s42 = scalar_select %p39, %s40, %s41
      %p45 = pneg %p39
      %p46 = scmp.eq.s32.totalorder %s16, 1
      %p47 = por %p45, %p46
      %p48 = scmp.ne.s32.totalorder %s40, %s43
      %p49 = scmp.eq.s32.totalorder %s16, 0
      %p50 = por %p48, %p49
      %p51 = scmp.ne.s32.totalorder %s40, %s43
      %p52 = scmp.eq.s32.totalorder %s21, 1
      %p53 = por %p51, %p52
      %p54 = scmp.ne.s32.totalorder %s43, %s44
      %p55 = scmp.eq.s32.totalorder %s21, 0
      %p56 = por %p54, %p55
      %p57 = scmp.ne.s32.totalorder %s43, %s44
      %p58 = scmp.eq.s32.totalorder %s22, 1
      %p59 = por %p57, %p58
      %p61 = scmp.ne.s32.totalorder %s44, %s60
      %p62 = scmp.eq.s32.totalorder %s22, 0
      %p63 = por %p61, %p62
      %s65 = sadd.s32 %s64, 1
      %p68 = scmp.eq.s32.totalorder %s16, 1
      %p69 = scmp.ne.s32.totalorder %s64, %s66
      %p70 = scmp.eq.s32.totalorder %s16, 0
      %p71 = por %p69, %p70
      %p72 = scmp.ne.s32.totalorder %s64, %s66
      %p73 = scmp.eq.s32.totalorder %s21, 1
      %p74 = por %p72, %p73
      %p75 = scmp.ne.s32.totalorder %s66, %s67
      %p76 = scmp.eq.s32.totalorder %s21, 0
      %p77 = por %p75, %p76
      %p78 = scmp.ne.s32.totalorder %s66, %s67
      %p79 = scmp.eq.s32.totalorder %s22, 1
      %p80 = por %p78, %p79
      %p82 = scmp.ne.s32.totalorder %s67, %s81
      %p83 = scmp.eq.s32.totalorder %s22, 0
      %p84 = por %p82, %p83
      %s85 = ssub.s32 %s23, %s35
      %p86 = scmp.eq.s32.totalorder %s85, 0
      %s88 = sadd.s32 %s87, 1
      %s89 = scalar_select %p86, %s87, %s88
      %p92 = pneg %p86
      %p93 = scmp.eq.s32.totalorder %s16, 1
      %p94 = por %p92, %p93
      %p95 = scmp.ne.s32.totalorder %s87, %s90
      %p96 = scmp.eq.s32.totalorder %s16, 0
      %p97 = por %p95, %p96
      %p98 = scmp.ne.s32.totalorder %s87, %s90
      %p99 = scmp.eq.s32.totalorder %s21, 1
      %p100 = por %p98, %p99
      %p101 = scmp.ne.s32.totalorder %s90, %s91
      %p102 = scmp.eq.s32.totalorder %s21, 0
      %p103 = por %p101, %p102
      %p104 = scmp.ne.s32.totalorder %s90, %s91
      %p105 = scmp.eq.s32.totalorder %s22, 1
      %p106 = por %p104, %p105
      %p108 = scmp.ne.s32.totalorder %s91, %s107
      %p109 = scmp.eq.s32.totalorder %s22, 0
      %p110 = por %p108, %p109
      %s111 = ssub.s32 %s23, %s35
      %p112 = scmp.eq.s32.totalorder %s111, 0
      %s114 = sadd.s32 %s113, 1
      %s115 = scalar_select %p112, %s113, %s114
      %p118 = pneg %p112
      %p119 = scmp.eq.s32.totalorder %s16, 1
      %p120 = por %p118, %p119
      %p121 = scmp.ne.s32.totalorder %s113, %s116
      %p122 = scmp.eq.s32.totalorder %s16, 0
      %p123 = por %p121, %p122
      %p124 = scmp.ne.s32.totalorder %s113, %s116
      %p125 = scmp.eq.s32.totalorder %s21, 1
      %p126 = por %p124, %p125
      %p127 = scmp.ne.s32.totalorder %s116, %s117
      %p128 = scmp.eq.s32.totalorder %s21, 0
      %p129 = por %p127, %p128
      %p130 = scmp.ne.s32.totalorder %s116, %s117
      %p131 = scmp.eq.s32.totalorder %s22, 1
      %p132 = por %p130, %p131
      %p134 = scmp.ne.s32.totalorder %s117, %s133
      %p135 = scmp.eq.s32.totalorder %s22, 0
      %p136 = por %p134, %p135
      %p137 = scmp.le.s32.totalorder 1, %s16
      %p138 = scmp.lt.s32.totalorder %s16, 3
      %p139 = pnand %p137, %p138
      %p140 = pneg %p139
      // Predicated region
      $region9: #{tpu_custom_call.1} parent=5 // pred_check
        _
      $region10: #{tpu_custom_call.1} parent=5 // pred_check_branch
        %142 = sbr.rel (%p139) target = $region12
      $region11: #{tpu_custom_call.1} parent=5 // pred_region
        %s143 = ssub.s32 %s16, 1
        // Predicated region
        $region13: #{tpu_custom_call.1} parent=11 // pred_check
          %p144 = pneg %p77
        $region14: #{tpu_custom_call.1} parent=11 // pred_check_branch
          %146 = sbr.rel (%p144) target = $region16
        $region15: #{tpu_custom_call.1} parent=11 // pred_region
          %s148 = ssub.s32 1024, 1024
          %149 = vsyncadd [#allocation7], %s148
          %s150 = sshll.u32 [#allocation6], 4
          %s151 = int_to_ptr.vmem [resolvable:$true] %s150
          %156 = dma.hbm_to_vmem [thread:$0]  %s1, 1024, %s151, [#allocation7], 64, 64, 4
        $region16: #{tpu_custom_call.1} parent=11 // pred_fallthru
          _
      $region12: #{tpu_custom_call.1} parent=5 // pred_fallthru
        _
      %p157 = scmp.lt.s32.totalorder %s16, 2
      // Predicated region
      $region17: #{tpu_custom_call.1} parent=5 // pred_check
        %p158 = pneg %p157
      $region18: #{tpu_custom_call.1} parent=5 // pred_check_branch
        %160 = sbr.rel (%p158) target = $region20
      $region19: #{tpu_custom_call.1} parent=5 // pred_region
        // Predicated region
        $region21: #{tpu_custom_call.1} parent=19 // pred_check
          %p161 = pneg %p50
        $region22: #{tpu_custom_call.1} parent=19 // pred_check_branch
          %163 = sbr.rel (%p161) target = $region24
        $region23: #{tpu_custom_call.1} parent=19 // pred_region
          %s164 = sand.u32 %s16, 1
          %s165 = scalar_lea.sflag [#allocation4], %s164
          %s166 = sand.u32 %s40, 1
          %s167 = smul.addr %s166, 32
          %s168 = scalar_lea.vmem [#allocation3], %s167
          %s169 = smul.u32 8, %s23
          %s171 = ssub.s32 512, 512
          %172 = vsyncadd %s165, %s171
          %s173 = sadd.s32 %s24, %s169
          %s174 = smul.addr %s173, 64
          %s175 = scalar_lea.hbm %s0, %s174
          %s176 = sshll.u32 %s168, 4
          %s177 = int_to_ptr.vmem [resolvable:$true] %s176
          %182 = dma.hbm_to_vmem [thread:$0]  %s175, 512, %s177, %s165, 64, 64, 4
        $region24: #{tpu_custom_call.1} parent=19 // pred_fallthru
          _
        // Predicated region
        $region25: #{tpu_custom_call.1} parent=19 // pred_check
          %p183 = pneg %p97
        $region26: #{tpu_custom_call.1} parent=19 // pred_check_branch
          %185 = sbr.rel (%p183) target = $region28
        $region27: #{tpu_custom_call.1} parent=19 // pred_region
          %s186 = sand.u32 %s16, 1
          %s187 = scalar_lea.sflag [#allocation4], %s186
          %s188 = sand.u32 %s87, 1
          %s189 = smul.addr %s188, 64
          %s190 = scalar_lea.vmem [#allocation8], %s189
          %s191 = smul.u32 8, %s23
          %s193 = ssub.s32 1024, 1024
          %194 = vsyncadd %s187, %s193
          %s195 = smul.addr %s191, 128
          %s196 = scalar_lea.hbm %s2, %s195
          %s197 = sshll.u32 %s190, 4
          %s198 = int_to_ptr.vmem [resolvable:$true] %s197
          %203 = dma.hbm_to_vmem [thread:$0]  %s196, 1024, %s198, %s187, 128, 128, 8
        $region28: #{tpu_custom_call.1} parent=19 // pred_fallthru
          _
      $region20: #{tpu_custom_call.1} parent=5 // pred_fallthru
        _
      %p204 = scmp.le.s32.totalorder 1, %s16
      %p205 = scmp.lt.s32.totalorder %s16, 3
      %p206 = pnand %p204, %p205
      %p207 = pneg %p206
      // Predicated region
      $region29: #{tpu_custom_call.1} parent=5 // pred_check
        _
      $region30: #{tpu_custom_call.1} parent=5 // pred_check_branch
        %209 = sbr.rel (%p206) target = $region32
      $region31: #{tpu_custom_call.1} parent=5 // pred_region
        %s210 = ssub.s32 %s16, 1
        %s211 = sand.u32 %s21, 1
        %s212 = scalar_lea.sflag [#allocation4], %s211
        %s213 = sand.u32 %s43, 1
        %s214 = smul.addr %s213, 32
        %s215 = scalar_lea.vmem [#allocation3], %s214
        // Predicated region
        $region33: #{tpu_custom_call.1} parent=31 // pred_check
          %p216 = pneg %p56
        $region34: #{tpu_custom_call.1} parent=31 // pred_check_branch
          %218 = sbr.rel (%p216) target = $region36
        $region35: #{tpu_custom_call.1} parent=31 // pred_region
          %219 = dma.done %s212, 512
        $region36: #{tpu_custom_call.1} parent=31 // pred_fallthru
          _
        // Predicated region
        $region37: #{tpu_custom_call.1} parent=31 // pred_check
          %p220 = pneg %p77
        $region38: #{tpu_custom_call.1} parent=31 // pred_check_branch
          %222 = sbr.rel (%p220) target = $region40
        $region39: #{tpu_custom_call.1} parent=31 // pred_region
          %223 = dma.done [#allocation7], 1024
        $region40: #{tpu_custom_call.1} parent=31 // pred_fallthru
          _
        %s224 = sand.u32 %s21, 1
        %s225 = scalar_lea.sflag [#allocation4], %s224
        %s226 = sand.u32 %s90, 1
        %s227 = smul.addr %s226, 64
        %s228 = scalar_lea.vmem [#allocation8], %s227
        // Predicated region
        $region41: #{tpu_custom_call.1} parent=31 // pred_check
          %p229 = pneg %p103
        $region42: #{tpu_custom_call.1} parent=31 // pred_check_branch
          %231 = sbr.rel (%p229) target = $region44
        $region43: #{tpu_custom_call.1} parent=31 // pred_region
          %232 = dma.done %s225, 1024
        $region44: #{tpu_custom_call.1} parent=31 // pred_fallthru
          _
        %s233 = sand.u32 %s21, 1
        %s234 = scalar_lea.sflag [#allocation4], %s233
        %s235 = sand.u32 %s43, 1
        %s236 = smul.addr %s235, 32
        %s237 = scalar_lea.vmem [#allocation3], %s236
        %p238 = pneg %p56
        %p239 = pneg %p53
        %p240 = pneg %p77
        %p241 = pneg %p74
        %s242 = sand.u32 %s21, 1
        %s243 = scalar_lea.sflag [#allocation4], %s242
        %s244 = sand.u32 %s90, 1
        %s245 = smul.addr %s244, 64
        %s246 = scalar_lea.vmem [#allocation8], %s245
        %p247 = pneg %p103
        %p248 = pneg %p100
        %p249 = pneg %p129
        %p250 = pneg %p126
        %s251 = sand.u32 %s116, 1
        %s252 = scalar_lea.sflag [#allocation5], %s251
        %s253 = sand.u32 %s116, 1
        %s254 = smul.addr %s253, 64
        %s255 = scalar_lea.vmem [#allocation9], %s254
        %s256 = smul.u32 8, %s25
        %s257 = smul.u32 8, %s25
        %s258 = smul.u32 8, %s25
        %p260 = scmp.eq.s32.totalorder %s26, 0
        // Predicated region
        $region45: #{tpu_custom_call.1} parent=31 // pred_check
          %p261 = pneg %p260
        $region46: #{tpu_custom_call.1} parent=31 // pred_check_branch
          %263 = sbr.rel (%p261) target = $region48
        $region47: #{tpu_custom_call.1} parent=31 // pred_region
          %264 = vst [vmem:[#allocation2] sm:$0xff] 0.0
          %265 = vst [vmem:[#allocation2 + $0x8] sm:$0xff] 0.0
          %266 = vst [vmem:[#allocation2 + $0x10] sm:$0xff] 0.0
          %267 = vst [vmem:[#allocation2 + $0x18] sm:$0xff] 0.0
          %268 = vst [vmem:[#allocation2 + $0x20] sm:$0xff] 0.0
          %269 = vst [vmem:[#allocation2 + $0x28] sm:$0xff] 0.0
          %270 = vst [vmem:[#allocation2 + $0x30] sm:$0xff] 0.0
          %271 = vst [vmem:[#allocation2 + $0x38] sm:$0xff] 0.0
        $region48: #{tpu_custom_call.1} parent=31 // pred_fallthru
          _
        %s272 = smul.u32 %s26, 128
        %s273 = sshra.s32 %s272, 3
        %s274 = sand.u32 %s272, 7
        %s275 = smul.addr %s273, 4
        %s276 = scalar_lea.vmem [#allocation6], %s275
        %v277 = vld [vmem:[%s276] sm:$0xf]
        %v278 = vld [vmem:[%s276 + $0x4] sm:$0xf]
        %v279 = vld [vmem:[%s276 + $0x8] sm:$0xf]
        %v280 = vld [vmem:[%s276 + $0xc] sm:$0xf]
        %v281 = vld [vmem:[%s276 + $0x10] sm:$0xf]
        %v282 = vld [vmem:[%s276 + $0x14] sm:$0xf]
        %v283 = vld [vmem:[%s276 + $0x18] sm:$0xf]
        %v284 = vld [vmem:[%s276 + $0x1c] sm:$0xf]
        %v285 = vld [vmem:[%s276 + $0x20] sm:$0xf]
        %v286 = vld [vmem:[%s276 + $0x24] sm:$0xf]
        %v287 = vld [vmem:[%s276 + $0x28] sm:$0xf]
        %v288 = vld [vmem:[%s276 + $0x2c] sm:$0xf]
        %v289 = vld [vmem:[%s276 + $0x30] sm:$0xf]
        %v290 = vld [vmem:[%s276 + $0x34] sm:$0xf]
        %v291 = vld [vmem:[%s276 + $0x38] sm:$0xf]
        %v292 = vld [vmem:[%s276 + $0x3c] sm:$0xf]
        %v293 = vld [vmem:[#allocation2] sm:$0xff]
        %v294 = vld [vmem:[#allocation2 + $0x8] sm:$0xff]
        %v295 = vld [vmem:[#allocation2 + $0x10] sm:$0xff]
        %v296 = vld [vmem:[#allocation2 + $0x18] sm:$0xff]
        %v297 = vld [vmem:[#allocation2 + $0x20] sm:$0xff]
        %v298 = vld [vmem:[#allocation2 + $0x28] sm:$0xff]
        %v299 = vld [vmem:[#allocation2 + $0x30] sm:$0xff]
        %v300 = vld [vmem:[#allocation2 + $0x38] sm:$0xff]
        %v301 = vld [vmem:[%s215] sm:$0xf]
        %v302 = vld [vmem:[%s215 + $0x4] sm:$0xf]
        %v303 = vld [vmem:[%s215 + $0x8] sm:$0xf]
        %v304 = vld [vmem:[%s215 + $0xc] sm:$0xf]
        %v305 = vld [vmem:[%s215 + $0x10] sm:$0xf]
        %v306 = vld [vmem:[%s215 + $0x14] sm:$0xf]
        %v307 = vld [vmem:[%s215 + $0x18] sm:$0xf]
        %v308 = vld [vmem:[%s215 + $0x1c] sm:$0xf]
        %v317 = vunpack.c.l.b16 %v301
        %v318 = vunpack.c.l.b16 %v302
        %v319 = vunpack.c.l.b16 %v303
        %v320 = vunpack.c.l.b16 %v304
        %v321 = vunpack.c.l.b16 %v305
        %v322 = vunpack.c.l.b16 %v306
        %v323 = vunpack.c.l.b16 %v307
        %v324 = vunpack.c.l.b16 %v308
        %v325 = vpack.c.b16 %v318, %v317
        %v326 = vpack.c.b16 %v320, %v319
        %v327 = vpack.c.b16 %v322, %v321
        %v328 = vpack.c.b16 %v324, %v323
        %v349 = vunpack.c.l.b16 %v277
        %v350 = vunpack.c.l.b16 %v278
        %v351 = vunpack.c.l.b16 %v279
        %v352 = vunpack.c.l.b16 %v280
        %v353 = vunpack.c.l.b16 %v281
        %v354 = vunpack.c.l.b16 %v282
        %v355 = vunpack.c.l.b16 %v283
        %v356 = vunpack.c.l.b16 %v284
        %v357 = vunpack.c.l.b16 %v285
        %v358 = vunpack.c.l.b16 %v286
        %v359 = vunpack.c.l.b16 %v287
        %v360 = vunpack.c.l.b16 %v288
        %v361 = vunpack.c.l.b16 %v289
        %v362 = vunpack.c.l.b16 %v290
        %v363 = vunpack.c.l.b16 %v291
        %v364 = vunpack.c.l.b16 %v292
        %v365 = vpack.c.b16 %v350, %v349
        %v366 = vpack.c.b16 %v352, %v351
        %v367 = vpack.c.b16 %v354, %v353
        %v368 = vpack.c.b16 %v356, %v355
        %v369 = vpack.c.b16 %v358, %v357
        %v370 = vpack.c.b16 %v360, %v359
        %v371 = vpack.c.b16 %v362, %v361
        %v372 = vpack.c.b16 %v364, %v363
        %381 = vmatprep.subr.bf16.mxu0 0
        %382 = vmatpush1.bf16.msra.mxu0 %v372
        %383 = vmatprep.subr.bf16.mxu0 0
        %384 = vmatpush1.bf16.msra.mxu0 %v371
        %385 = vmatprep.subr.bf16.mxu0 0
        %386 = vmatpush1.bf16.msra.mxu0 %v370
        %387 = vmatprep.subr.bf16.mxu0 0
        %388 = vmatpush1.bf16.msra.mxu0 %v369
        %389 = vmatprep.subr.bf16.mxu0 0
        %390 = vmatpush1.bf16.msra.mxu0 %v368
        %391 = vmatprep.subr.bf16.mxu0 0
        %392 = vmatpush1.bf16.msra.mxu0 %v367
        %393 = vmatprep.subr.bf16.mxu0 0
        %394 = vmatpush1.bf16.msra.mxu0 %v366
        %395 = vmatprep.subr.bf16.mxu0 0
        %396 = vmatpush1.bf16.msra.mxu0 %v365
        %397 = vmatprep.subr.bf16.mxu0 0
        %398 = vmatpush2.bf16.msra.mxu0 0
        %399 = vmatprep.subr.bf16.mxu0 0
        %400 = vmatpush2.bf16.msra.mxu0 0
        %401 = vmatprep.subr.bf16.mxu0 0
        %402 = vmatpush2.bf16.msra.mxu0 0
        %403 = vmatprep.subr.bf16.mxu0 0
        %404 = vmatpush2.bf16.msra.mxu0 0
        %405 = vmatprep.subr.bf16.mxu0 0
        %406 = vmatpush2.bf16.msra.mxu0 0
        %407 = vmatprep.subr.bf16.mxu0 0
        %408 = vmatpush2.bf16.msra.mxu0 0
        %409 = vmatprep.subr.bf16.mxu0 0
        %410 = vmatpush2.bf16.msra.mxu0 0
        %411 = vmatprep.subr.bf16.mxu0 0
        %412 = vmatpush2.bf16.msra.mxu0 0
        %413 = vmatprep.mubr.bf16.mxu0 0
        %414 = vmatmul.mubr.bf16.gmra.mxu0 %v325
        %v415 = vpop.f32.mrf.mxu0
        %v416 = vadd.f32 0.0, %v415
        %v417 = vpop.f32.mrf.mxu0
        %v418 = vpop.f32.mrf.mxu0
        %v419 = vadd.f32 0.0, %v418
        %v420 = vpop.f32.mrf.mxu0
        %421 = vmatprep.mubr.bf16.mxu0 0
        %422 = vmatmul.mubr.bf16.gmra.mxu0 %v326
        %v423 = vpop.f32.mrf.mxu0
        %v424 = vadd.f32 0.0, %v423
        %v425 = vpop.f32.mrf.mxu0
        %v426 = vpop.f32.mrf.mxu0
        %v427 = vadd.f32 0.0, %v426
        %v428 = vpop.f32.mrf.mxu0
        %429 = vmatprep.mubr.bf16.mxu0 0
        %430 = vmatmul.mubr.bf16.gmra.mxu0 %v327
        %v431 = vpop.f32.mrf.mxu0
        %v432 = vadd.f32 0.0, %v431
        %v433 = vpop.f32.mrf.mxu0
        %v434 = vpop.f32.mrf.mxu0
        %v435 = vadd.f32 0.0, %v434
        %v436 = vpop.f32.mrf.mxu0
        %437 = vmatprep.mubr.bf16.mxu0 0
        %438 = vmatmul.mubr.bf16.gmra.mxu0 %v328
        %v439 = vpop.f32.mrf.mxu0
        %v440 = vadd.f32 0.0, %v439
        %v441 = vpop.f32.mrf.mxu0
        %v442 = vpop.f32.mrf.mxu0
        %v443 = vadd.f32 0.0, %v442
        %v444 = vpop.f32.mrf.mxu0
        %445 = vdwg.mxu0
        %v446 = vadd.f32 %v293, %v416
        %v447 = vadd.f32 %v294, %v419
        %v448 = vadd.f32 %v295, %v424
        %v449 = vadd.f32 %v296, %v427
        %v450 = vadd.f32 %v297, %v432
        %v451 = vadd.f32 %v298, %v435
        %v452 = vadd.f32 %v299, %v440
        %v453 = vadd.f32 %v300, %v443
        %454 = vst [vmem:[#allocation2] sm:$0xff] %v446
        %455 = vst [vmem:[#allocation2 + $0x8] sm:$0xff] %v447
        %456 = vst [vmem:[#allocation2 + $0x10] sm:$0xff] %v448
        %457 = vst [vmem:[#allocation2 + $0x18] sm:$0xff] %v449
        %458 = vst [vmem:[#allocation2 + $0x20] sm:$0xff] %v450
        %459 = vst [vmem:[#allocation2 + $0x28] sm:$0xff] %v451
        %460 = vst [vmem:[#allocation2 + $0x30] sm:$0xff] %v452
        %461 = vst [vmem:[#allocation2 + $0x38] sm:$0xff] %v453
        // Predicated region
        $region49: #{tpu_custom_call.1} parent=31 // pred_check
          %p462 = pneg %p260
        $region50: #{tpu_custom_call.1} parent=31 // pred_check_branch
          %464 = sbr.rel (%p462) target = $region52
        $region51: #{tpu_custom_call.1} parent=31 // pred_region
          %v465 = vld [vmem:[#allocation2] sm:$0xff]
          %v466 = vld [vmem:[#allocation2 + $0x8] sm:$0xff]
          %v467 = vld [vmem:[#allocation2 + $0x10] sm:$0xff]
          %v468 = vld [vmem:[#allocation2 + $0x18] sm:$0xff]
          %v469 = vld [vmem:[#allocation2 + $0x20] sm:$0xff]
          %v470 = vld [vmem:[#allocation2 + $0x28] sm:$0xff]
          %v471 = vld [vmem:[#allocation2 + $0x30] sm:$0xff]
          %v472 = vld [vmem:[#allocation2 + $0x38] sm:$0xff]
          %v473 = vmul.f32 %v465, 0.9
          %v474 = vmul.f32 %v466, 0.9
          %v475 = vmul.f32 %v467, 0.9
          %v476 = vmul.f32 %v468, 0.9
          %v477 = vmul.f32 %v469, 0.9
          %v478 = vmul.f32 %v470, 0.9
          %v479 = vmul.f32 %v471, 0.9
          %v480 = vmul.f32 %v472, 0.9
          %v481 = vld [vmem:[%s228] sm:$0xff]
          %v482 = vld [vmem:[%s228 + $0x8] sm:$0xff]
          %v483 = vld [vmem:[%s228 + $0x10] sm:$0xff]
          %v484 = vld [vmem:[%s228 + $0x18] sm:$0xff]
          %v485 = vld [vmem:[%s228 + $0x20] sm:$0xff]
          %v486 = vld [vmem:[%s228 + $0x28] sm:$0xff]
          %v487 = vld [vmem:[%s228 + $0x30] sm:$0xff]
          %v488 = vld [vmem:[%s228 + $0x38] sm:$0xff]
          %v489 = vmul.f32 %v481, 0.1
          %v490 = vmul.f32 %v482, 0.1
          %v491 = vmul.f32 %v483, 0.1
          %v492 = vmul.f32 %v484, 0.1
          %v493 = vmul.f32 %v485, 0.1
          %v494 = vmul.f32 %v486, 0.1
          %v495 = vmul.f32 %v487, 0.1
          %v496 = vmul.f32 %v488, 0.1
          %v497 = vadd.f32 %v473, %v489
          %v498 = vadd.f32 %v474, %v490
          %v499 = vadd.f32 %v475, %v491
          %v500 = vadd.f32 %v476, %v492
          %v501 = vadd.f32 %v477, %v493
          %v502 = vadd.f32 %v478, %v494
          %v503 = vadd.f32 %v479, %v495
          %v504 = vadd.f32 %v480, %v496
          %505 = vst [vmem:[%s255] sm:$0xff] %v497
          %506 = vst [vmem:[%s255 + $0x8] sm:$0xff] %v498
          %507 = vst [vmem:[%s255 + $0x10] sm:$0xff] %v499
          %508 = vst [vmem:[%s255 + $0x18] sm:$0xff] %v500
          %509 = vst [vmem:[%s255 + $0x20] sm:$0xff] %v501
          %510 = vst [vmem:[%s255 + $0x28] sm:$0xff] %v502
          %511 = vst [vmem:[%s255 + $0x30] sm:$0xff] %v503
          %512 = vst [vmem:[%s255 + $0x38] sm:$0xff] %v504
        $region52: #{tpu_custom_call.1} parent=31 // pred_fallthru
          _
        %s513 = sand.u32 %s116, 1
        %s514 = scalar_lea.sflag [#allocation5], %s513
        %s515 = sand.u32 %s116, 1
        %s516 = smul.addr %s515, 64
        %s517 = scalar_lea.vmem [#allocation9], %s516
        // Predicated region
        $region53: #{tpu_custom_call.1} parent=31 // pred_check
          %p518 = pneg %p126
        $region54: #{tpu_custom_call.1} parent=31 // pred_check_branch
          %520 = sbr.rel (%p518) target = $region56
        $region55: #{tpu_custom_call.1} parent=31 // pred_region
          %s521 = smul.u32 8, %s25
          %s523 = ssub.s32 1024, 1024
          %524 = vsyncadd %s514, %s523
          %s525 = smul.addr %s521, 128
          %s526 = scalar_lea.hbm %s3, %s525
          %s527 = sshll.u32 %s517, 4
          %s528 = int_to_ptr.vmem [resolvable:$true] %s527
          %533 = dma.vmem_to_hbm [thread:$0]  %s528, 1024, %s526, %s514, 128, 128, 8
        $region56: #{tpu_custom_call.1} parent=31 // pred_fallthru
          _
      $region32: #{tpu_custom_call.1} parent=5 // pred_fallthru
        _
      %p534 = scmp.le.s32.totalorder 2, %s16
      // Predicated region
      $region57: #{tpu_custom_call.1} parent=5 // pred_check
        %p535 = pneg %p534
      $region58: #{tpu_custom_call.1} parent=5 // pred_check_branch
        %537 = sbr.rel (%p535) target = $region60
      $region59: #{tpu_custom_call.1} parent=5 // pred_region
        %s538 = ssub.s32 %s16, 2
        // Predicated region
        $region61: #{tpu_custom_call.1} parent=59 // pred_check
          %p539 = pneg %p132
        $region62: #{tpu_custom_call.1} parent=59 // pred_check_branch
          %541 = sbr.rel (%p539) target = $region64
        $region63: #{tpu_custom_call.1} parent=59 // pred_region
          %s542 = sand.u32 %s117, 1
          %s543 = scalar_lea.sflag [#allocation5], %s542
          %s544 = sand.u32 %s117, 1
          %s545 = smul.addr %s544, 64
          %s546 = scalar_lea.vmem [#allocation9], %s545
          %547 = dma.done %s543, 1024
        $region64: #{tpu_custom_call.1} parent=59 // pred_fallthru
          _
      $region60: #{tpu_custom_call.1} parent=5 // pred_fallthru
        _
    $region6: #{tpu_custom_call.1} parent=1 // loop_footer
      %s20 = sadd.s32 1, %s16
    $region7: #{tpu_custom_call.1} parent=1 // loop_footer_branch
      %15 = sbr.rel target = $region3
    $region8: #{tpu_custom_call.1} parent=1 // loop_exit
      _
    %548 = vsyncpa [#allocation4], 1
    %s549 = scalar_lea.sflag [#allocation4], 1
    %550 = vsyncpa %s549, 1
    %551 = vsyncpa [#allocation7], 1
    %552 = vsyncpa [#allocation5], 1
    %s553 = scalar_lea.sflag [#allocation5], 1
    %554 = vsyncpa %s553, 1

</llo_original>
